<compile_context>
chip_gen: v6e
topology: v6e:2x2x1
jax: 0.10.0
libtpu: 0.0.40
codegen_flags: <defaults>
</compile_context>

<pallas_src>
import jax
import jax.numpy as jnp
from jax.experimental import pallas as pl
from jax.experimental.pallas import tpu as pltpu


_SUBLANE = 8      # sublane (second-to-last dim) granularity
_MAX_TM = 2048    # max batch rows per grid step (VMEM per tile stays tiny)


def _round_up(n: int, m: int) -> int:
    return ((n + m - 1) // m) * m


def _choose_tm(batch: int) -> int:
    """Batch tile size: full batch for tiny B, else sublane-aligned and sized
    so the grid has at least 2 steps (v7x megacore sharding)."""
    if batch <= _SUBLANE:
        # Block == full array dim -> always a legal block shape.
        return batch
    half = _round_up(pl.cdiv(batch, 2), _SUBLANE)   # >= 2 grid steps
    return min(_MAX_TM, half)


def _mlp_kernel(x_ref, w1_ref, b1_ref, w2_ref, b2_ref, o_ref):
    """o = relu(x @ W1 + b1) @ W2 + b2, fully fused in VMEM (all f32).

    x_ref:  (TM, D_in)    f32
    w1_ref: (D_in, H)     f32
    b1_ref: (1, H)        f32
    w2_ref: (H, D_out)    f32
    b2_ref: (1, D_out)    f32
    o_ref:  (TM, D_out)   f32
    """
    h = jnp.dot(x_ref[...], w1_ref[...], preferred_element_type=jnp.float32)
    h = jnp.maximum(h + b1_ref[...], 0.0)
    y = jnp.dot(h, w2_ref[...], preferred_element_type=jnp.float32)
    o_ref[...] = (y + b2_ref[...]).astype(o_ref.dtype)


def _pallas_mlp(x, w1, b1, w2, b2):
    """Batch-tiled fused MLP forward; returns the (B, D_out) f32 result."""
    B, D_in = x.shape
    H = w1.shape[1]
    D_out = w2.shape[1]

    TM = _choose_tm(B)
    grid = (pl.cdiv(B, TM),)   # ragged last block handled by Pallas

    return pl.pallas_call(
        _mlp_kernel,
        out_shape=jax.ShapeDtypeStruct((B, D_out), jnp.float32),
        grid=grid,
        in_specs=[
            pl.BlockSpec((TM, D_in), lambda i: (i, 0)),    # x: tiled over batch
            pl.BlockSpec((D_in, H), lambda i: (0, 0)),     # W1: VMEM-resident
            pl.BlockSpec((1, H), lambda i: (0, 0)),        # b1: VMEM-resident
            pl.BlockSpec((H, D_out), lambda i: (0, 0)),    # W2: VMEM-resident
            pl.BlockSpec((1, D_out), lambda i: (0, 0)),    # b2: VMEM-resident
        ],
        out_specs=pl.BlockSpec((TM, D_out), lambda i: (i, 0)),
        compiler_params=pltpu.CompilerParams(
            # Batch tiles are independent -> megacore sharding on v7x.
            dimension_semantics=("parallel",),
        ),
    )(x, w1, b1, w2, b2)


def checkpoint_module_forward(x, w1, b1, w2, b2):
    """Forward of CheckpointModule(nn.Sequential(Linear, ReLU, Linear)).

    torch.utils.checkpoint.checkpoint  <->  jax.checkpoint (remat):
    forward values identical; only backward recompute behavior differs.
    """
    return jax.checkpoint(_pallas_mlp)(x, w1, b1, w2, b2)


if __name__ == "__main__":
    # Small shapes consistent with the wrapped Sequential:
    # batch=8, in=32, hidden=64, out=32.
    B, D_in, H, D_out = 8, 32, 64, 32

    key = jax.random.PRNGKey(0)
    kx, k1, k2, k3, k4 = jax.random.split(key, 5)

    x = jax.random.normal(kx, (B, D_in), dtype=jnp.float32)
    # Deterministic parameter init (analogous to torch Linear init scale).
    w1 = jax.random.uniform(k1, (D_in, H), minval=-1.0, maxval=1.0,
                            dtype=jnp.float32) / jnp.sqrt(D_in)
    b1 = jax.random.uniform(k2, (1, H), minval=-1.0, maxval=1.0,
                            dtype=jnp.float32) / jnp.sqrt(D_in)
    w2 = jax.random.uniform(k3, (H, D_out), minval=-1.0, maxval=1.0,
                            dtype=jnp.float32) / jnp.sqrt(H)
    b2 = jax.random.uniform(k4, (1, D_out), minval=-1.0, maxval=1.0,
                            dtype=jnp.float32) / jnp.sqrt(H)

    y = jax.jit(checkpoint_module_forward)(x, w1, b1, w2, b2)
    jax.block_until_ready(y)
    assert y.shape == (B, D_out)

    # Pure-f32 reference of the wrapped Sequential's forward.
    y_ref = jnp.maximum(x @ w1 + b1, 0.0) @ w2 + b2
    assert jnp.allclose(y, y_ref, atol=2e-2, rtol=2e-2)

    print("KERNEL_OK")
</pallas_src>

<mosaic_0001>
module attributes {stable_mosaic.version = 11 : i64} {
  func.func @_mlp_kernel(%arg0: i32, %arg1: memref<8x32xf32, #tpu.memory_space<vmem>>, %arg2: memref<32x64xf32, #tpu.memory_space<vmem>>, %arg3: memref<1x64xf32, #tpu.memory_space<vmem>>, %arg4: memref<64x32xf32, #tpu.memory_space<vmem>>, %arg5: memref<1x32xf32, #tpu.memory_space<vmem>>, %arg6: memref<8x32xf32, #tpu.memory_space<vmem>>) attributes {dimension_semantics = [#tpu.dimension_semantics<parallel>], iteration_bounds = array<i64: 1>, scalar_prefetch = 0 : i64, scratch_operands = 0 : i64, tpu.core_type = #tpu.core_type<tc>, window_params = [{transform_indices = @transform_0, window_bounds = array<i64: 8, 32>}, {pipeline_mode = #tpu.pipeline_mode<synchronous>, transform_indices = @transform_1, window_bounds = array<i64: 32, 64>}, {pipeline_mode = #tpu.pipeline_mode<synchronous>, transform_indices = @transform_2, window_bounds = array<i64: 1, 64>}, {pipeline_mode = #tpu.pipeline_mode<synchronous>, transform_indices = @transform_3, window_bounds = array<i64: 64, 32>}, {pipeline_mode = #tpu.pipeline_mode<synchronous>, transform_indices = @transform_4, window_bounds = array<i64: 1, 32>}, {transform_indices = @transform_5, window_bounds = array<i64: 8, 32>}]} {
    %c0 = arith.constant 0 : index
    %c0_0 = arith.constant 0 : index
    %0 = vector.load %arg1[%c0, %c0_0] : memref<8x32xf32, #tpu.memory_space<vmem>>, vector<8x32xf32>
    %c0_1 = arith.constant 0 : index
    %c0_2 = arith.constant 0 : index
    %1 = vector.load %arg2[%c0_1, %c0_2] : memref<32x64xf32, #tpu.memory_space<vmem>>, vector<32x64xf32>
    %cst = arith.constant dense<0.000000e+00> : vector<8x64xf32>
    %2 = tpu.matmul %0, %1, %cst {dimension_numbers = #tpu.dot_dimension_numbers<[1], [0], [0], [1], [0, 0, 1, 1], [], []>} : vector<8x32xf32>, vector<32x64xf32>, vector<8x64xf32> -> vector<8x64xf32>
    %c0_3 = arith.constant 0 : index
    %c0_4 = arith.constant 0 : index
    %3 = vector.load %arg3[%c0_3, %c0_4] : memref<1x64xf32, #tpu.memory_space<vmem>>, vector<1x64xf32>
    %4 = vector.broadcast %3 : vector<1x64xf32> to vector<8x64xf32>
    %5 = arith.addf %2, %4 : vector<8x64xf32>
    %cst_5 = arith.constant 0.000000e+00 : f32
    %6 = vector.broadcast %cst_5 : f32 to vector<8x64xf32>
    %7 = arith.maximumf %5, %6 : vector<8x64xf32>
    %c0_6 = arith.constant 0 : index
    %c0_7 = arith.constant 0 : index
    %8 = vector.load %arg4[%c0_6, %c0_7] : memref<64x32xf32, #tpu.memory_space<vmem>>, vector<64x32xf32>
    %cst_8 = arith.constant dense<0.000000e+00> : vector<8x32xf32>
    %9 = tpu.matmul %7, %8, %cst_8 {dimension_numbers = #tpu.dot_dimension_numbers<[1], [0], [0], [1], [0, 0, 1, 1], [], []>} : vector<8x64xf32>, vector<64x32xf32>, vector<8x32xf32> -> vector<8x32xf32>
    %c0_9 = arith.constant 0 : index
    %c0_10 = arith.constant 0 : index
    %10 = vector.load %arg5[%c0_9, %c0_10] : memref<1x32xf32, #tpu.memory_space<vmem>>, vector<1x32xf32>
    %11 = vector.broadcast %10 : vector<1x32xf32> to vector<8x32xf32>
    %12 = arith.addf %9, %11 : vector<8x32xf32>
    %c0_11 = arith.constant 0 : index
    %c0_12 = arith.constant 0 : index
    %13 = vector.load %arg6[%c0_11, %c0_12] : memref<8x32xf32, #tpu.memory_space<vmem>>, vector<8x32xf32>
    tpu.vector_store %arg6[%c0_11, %c0_12], %12 {strides = array<i32>} : memref<8x32xf32, #tpu.memory_space<vmem>>, vector<8x32xf32>,
    return
  }
  func.func @transform_0(%arg0: i32) -> (i32, i32) {
    %c0_i32 = arith.constant 0 : i32
    %c0_i32_0 = arith.constant 0 : i32
    return %arg0, %c0_i32 : i32, i32
  }
  func.func @transform_1(%arg0: i32) -> (i32, i32) {
    %c0_i32 = arith.constant 0 : i32
    %c0_i32_0 = arith.constant 0 : i32
    %c0_i32_1 = arith.constant 0 : i32
    return %c0_i32, %c0_i32_0 : i32, i32
  }
  func.func @transform_2(%arg0: i32) -> (i32, i32) {
    %c0_i32 = arith.constant 0 : i32
    %c0_i32_0 = arith.constant 0 : i32
    %c0_i32_1 = arith.constant 0 : i32
    return %c0_i32, %c0_i32_0 : i32, i32
  }
  func.func @transform_3(%arg0: i32) -> (i32, i32) {
    %c0_i32 = arith.constant 0 : i32
    %c0_i32_0 = arith.constant 0 : i32
    %c0_i32_1 = arith.constant 0 : i32
    return %c0_i32, %c0_i32_0 : i32, i32
  }
  func.func @transform_4(%arg0: i32) -> (i32, i32) {
    %c0_i32 = arith.constant 0 : i32
    %c0_i32_0 = arith.constant 0 : i32
    %c0_i32_1 = arith.constant 0 : i32
    return %c0_i32, %c0_i32_0 : i32, i32
  }
  func.func @transform_5(%arg0: i32) -> (i32, i32) {
    %c0_i32 = arith.constant 0 : i32
    %c0_i32_0 = arith.constant 0 : i32
    return %arg0, %c0_i32 : i32, i32
  }
}

</mosaic_0001>

<llo_original>
// kernel: checkpoint.1
$region0: #{checkpoint.1}
  #allocation0 [shape = 'u32[]', space=smem, size = 0x4, offset = 0x4, fixed_abs, tag = 'smem constant byte address 0x4 - core index']
  #allocation1 [shape = 'u32[144,128]{1,0:T(1,128)}', space=vmem, size = 0x12000, scoped, tag = 'internal scratch']
  %s0 = inlined_call_operand.vmem [shape: f32[8,32], index: 0, kind: input, shape index: {}]
  %s1 = inlined_call_operand.vmem [shape: f32[32,64], index: 1, kind: input, shape index: {}]
  %s2 = inlined_call_operand.vmem [shape: f32[1,64], index: 2, kind: input, shape index: {}]
  %s3 = inlined_call_operand.vmem [shape: f32[64,32], index: 3, kind: input, shape index: {}]
  %s4 = inlined_call_operand.vmem [shape: f32[1,32], index: 4, kind: input, shape index: {}]
  %s5 = inlined_call_operand.hbm [shape: f32[8,32], index: 5, kind: output, shape index: {}]
  %s6 = sld [smem:[#allocation0]]
  $region30: #{checkpoint.1} parent=0
    _
  %s8 = ssub.s32 1, %s6
  %s9 = scalar_select 0, %s8, %s6
  $region1: #{checkpoint.1} parent=0
    #allocation2 [shape = 'u8[4096]{0}', space=vmem, size = 0x1000, scoped, tag = 'output window, operand 0, single buffered']
    #allocation3 [shape = 's32[1]{0}', space=sflag, size = 0x4, scoped, tag = 'scoped memory for checkpoint.1']
    %10 = vsyncpa [#allocation3], 0
    // Predicated region
    $region2: #{checkpoint.1} parent=1 // pred_check
      _
    $region3: #{checkpoint.1} parent=1 // pred_check_branch
      %12 = sbr.rel (0) target = $region5
    $region4: #{checkpoint.1} parent=1 // pred_region
      _
    $region5: #{checkpoint.1} parent=1 // pred_fallthru
      _
    // Predicated region
    $region6: #{checkpoint.1} parent=1 // pred_check
      _
    $region7: #{checkpoint.1} parent=1 // pred_check_branch
      %14 = sbr.rel (0) target = $region9
    $region8: #{checkpoint.1} parent=1 // pred_region
      _
    $region9: #{checkpoint.1} parent=1 // pred_fallthru
      _
    // Predicated region
    $region10: #{checkpoint.1} parent=1 // pred_check
      _
    $region11: #{checkpoint.1} parent=1 // pred_check_branch
      %16 = sbr.rel (0) target = $region13
    $region12: #{checkpoint.1} parent=1 // pred_region
      _
    $region13: #{checkpoint.1} parent=1 // pred_fallthru
      _
    // Predicated region
    $region14: #{checkpoint.1} parent=1 // pred_check
      _
    $region15: #{checkpoint.1} parent=1 // pred_check_branch
      %18 = sbr.rel (0) target = $region17
    $region16: #{checkpoint.1} parent=1 // pred_region
      _
    $region17: #{checkpoint.1} parent=1 // pred_fallthru
      _
    // Predicated region
    $region18: #{checkpoint.1} parent=1 // pred_check
      _
    $region19: #{checkpoint.1} parent=1 // pred_check_branch
      %20 = sbr.rel (0) target = $region21
    $region20: #{checkpoint.1} parent=1 // pred_region
      _
    $region21: #{checkpoint.1} parent=1 // pred_fallthru
      _
    %v21 = vld [vmem:[%s0] sm:$0xff]
    %v22 = vld [vmem:[%s1] sm:$0xff]
    %v23 = vld [vmem:[%s1 + $0x8] sm:$0xff]
    %v24 = vld [vmem:[%s1 + $0x10] sm:$0xff]
    %v25 = vld [vmem:[%s1 + $0x18] sm:$0xff]
    %v26 = vld [vmem:[%s2] sm:$0x1]
    %v28 = vlaneseq
    %v29 = vshrl.u32 %v28, 7
    %v30 = vsub.s32 0, %v29
    %v31 = vrot.slane %v26, %v30
    %vm33 = vcmask 261120
    %v35 = vsel %vm33, %v21, 0
    %37 = vmatprep.subr.mxu0 0.0
    %38 = vmatpush1.msra.mxu0 0.0
    %39 = vmatprep.subr.mxu0 0.0
    %40 = vmatpush1.msra.mxu0 0.0
    %41 = vmatprep.subr.mxu0 0.0
    %42 = vmatpush1.msra.mxu0 0.0
    %43 = vmatprep.subr.mxu0 0.0
    %44 = vmatpush1.msra.mxu0 0.0
    %45 = vmatprep.subr.mxu0 0.0
    %46 = vmatpush1.msra.mxu0 0.0
    %47 = vmatprep.subr.mxu0 0.0
    %48 = vmatpush1.msra.mxu0 0.0
    %49 = vmatprep.subr.mxu0 0.0
    %50 = vmatpush1.msra.mxu0 0.0
    %51 = vmatprep.subr.mxu0 0.0
    %52 = vmatpush1.msra.mxu0 0.0
    %53 = vmatprep.subr.mxu0 0.0
    %54 = vmatpush1.msra.mxu0 0.0
    %55 = vmatprep.subr.mxu0 0.0
    %56 = vmatpush1.msra.mxu0 0.0
    %57 = vmatprep.subr.mxu0 0.0
    %58 = vmatpush1.msra.mxu0 0.0
    %59 = vmatprep.subr.mxu0 0.0
    %60 = vmatpush1.msra.mxu0 0.0
    %61 = vmatprep.subr.mxu0 0.0
    %62 = vmatpush1.msra.mxu0 %v25
    %63 = vmatprep.subr.mxu0 0.0
    %64 = vmatpush1.msra.mxu0 %v24
    %65 = vmatprep.subr.mxu0 0.0
    %66 = vmatpush1.msra.mxu0 %v23
    %67 = vmatprep.subr.mxu0 0.0
    %68 = vmatpush1.msra.mxu0 %v22
    %69 = vmatprep.subr.mxu0 0.0
    %70 = vmatpush2.msra.mxu0 0.0
    %71 = vmatprep.subr.mxu0 0.0
    %72 = vmatpush2.msra.mxu0 0.0
    %73 = vmatprep.subr.mxu0 0.0
    %74 = vmatpush2.msra.mxu0 0.0
    %75 = vmatprep.subr.mxu0 0.0
    %76 = vmatpush2.msra.mxu0 0.0
    %77 = vmatprep.subr.mxu0 0.0
    %78 = vmatpush2.msra.mxu0 0.0
    %79 = vmatprep.subr.mxu0 0.0
    %80 = vmatpush2.msra.mxu0 0.0
    %81 = vmatprep.subr.mxu0 0.0
    %82 = vmatpush2.msra.mxu0 0.0
    %83 = vmatprep.subr.mxu0 0.0
    %84 = vmatpush2.msra.mxu0 0.0
    %85 = vmatprep.subr.mxu0 0.0
    %86 = vmatpush2.msra.mxu0 0.0
    %87 = vmatprep.subr.mxu0 0.0
    %88 = vmatpush2.msra.mxu0 0.0
    %89 = vmatprep.subr.mxu0 0.0
    %90 = vmatpush2.msra.mxu0 0.0
    %91 = vmatprep.subr.mxu0 0.0
    %92 = vmatpush2.msra.mxu0 0.0
    %93 = vmatprep.subr.mxu0 0.0
    %94 = vmatpush2.msra.mxu0 0.0
    %95 = vmatprep.subr.mxu0 0.0
    %96 = vmatpush2.msra.mxu0 0.0
    %97 = vmatprep.subr.mxu0 0.0
    %98 = vmatpush2.msra.mxu0 0.0
    %99 = vmatprep.subr.mxu0 0.0
    %100 = vmatpush2.msra.mxu0 0.0
    %101 = vmatprep.mubr.f32.mxu0 0.0
    %102 = vmatmul.mubr.f32.gmra.mxu0 %v35
    %v103 = vpop.f32.mrf.mxu0
    %v104 = vadd.f32 %v31, %v103
    %v105 = vpop.f32.mrf.mxu0
    %106 = vdwg.mxu0
    %v107 = vmax.f32 %v104, 0.0
    %v108 = vld [vmem:[%s3] sm:$0xff]
    %v109 = vld [vmem:[%s3 + $0x8] sm:$0xff]
    %v110 = vld [vmem:[%s3 + $0x10] sm:$0xff]
    %v111 = vld [vmem:[%s3 + $0x18] sm:$0xff]
    %v112 = vld [vmem:[%s3 + $0x20] sm:$0xff]
    %v113 = vld [vmem:[%s3 + $0x28] sm:$0xff]
    %v114 = vld [vmem:[%s3 + $0x30] sm:$0xff]
    %v115 = vld [vmem:[%s3 + $0x38] sm:$0xff]
    %v116 = vld [vmem:[%s4] sm:$0x1]
    %v118 = vlaneseq
    %v119 = vshrl.u32 %v118, 7
    %v120 = vsub.s32 0, %v119
    %v121 = vrot.slane %v116, %v120
    %vm123 = vcmask 523264
    %v125 = vsel %vm123, %v107, 0
    %127 = vmatprep.subr.mxu0 0.0
    %128 = vmatpush1.msra.mxu0 0.0
    %129 = vmatprep.subr.mxu0 0.0
    %130 = vmatpush1.msra.mxu0 0.0
    %131 = vmatprep.subr.mxu0 0.0
    %132 = vmatpush1.msra.mxu0 0.0
    %133 = vmatprep.subr.mxu0 0.0
    %134 = vmatpush1.msra.mxu0 0.0
    %135 = vmatprep.subr.mxu0 0.0
    %136 = vmatpush1.msra.mxu0 0.0
    %137 = vmatprep.subr.mxu0 0.0
    %138 = vmatpush1.msra.mxu0 0.0
    %139 = vmatprep.subr.mxu0 0.0
    %140 = vmatpush1.msra.mxu0 0.0
    %141 = vmatprep.subr.mxu0 0.0
    %142 = vmatpush1.msra.mxu0 0.0
    %143 = vmatprep.subr.mxu0 0.0
    %144 = vmatpush1.msra.mxu0 %v115
    %145 = vmatprep.subr.mxu0 0.0
    %146 = vmatpush1.msra.mxu0 %v114
    %147 = vmatprep.subr.mxu0 0.0
    %148 = vmatpush1.msra.mxu0 %v113
    %149 = vmatprep.subr.mxu0 0.0
    %150 = vmatpush1.msra.mxu0 %v112
    %151 = vmatprep.subr.mxu0 0.0
    %152 = vmatpush1.msra.mxu0 %v111
    %153 = vmatprep.subr.mxu0 0.0
    %154 = vmatpush1.msra.mxu0 %v110
    %155 = vmatprep.subr.mxu0 0.0
    %156 = vmatpush1.msra.mxu0 %v109
    %157 = vmatprep.subr.mxu0 0.0
    %158 = vmatpush1.msra.mxu0 %v108
    %159 = vmatprep.subr.mxu0 0.0
    %160 = vmatpush2.msra.mxu0 0.0
    %161 = vmatprep.subr.mxu0 0.0
    %162 = vmatpush2.msra.mxu0 0.0
    %163 = vmatprep.subr.mxu0 0.0
    %164 = vmatpush2.msra.mxu0 0.0
    %165 = vmatprep.subr.mxu0 0.0
    %166 = vmatpush2.msra.mxu0 0.0
    %167 = vmatprep.subr.mxu0 0.0
    %168 = vmatpush2.msra.mxu0 0.0
    %169 = vmatprep.subr.mxu0 0.0
    %170 = vmatpush2.msra.mxu0 0.0
    %171 = vmatprep.subr.mxu0 0.0
    %172 = vmatpush2.msra.mxu0 0.0
    %173 = vmatprep.subr.mxu0 0.0
    %174 = vmatpush2.msra.mxu0 0.0
    %175 = vmatprep.subr.mxu0 0.0
    %176 = vmatpush2.msra.mxu0 0.0
    %177 = vmatprep.subr.mxu0 0.0
    %178 = vmatpush2.msra.mxu0 0.0
    %179 = vmatprep.subr.mxu0 0.0
    %180 = vmatpush2.msra.mxu0 0.0
    %181 = vmatprep.subr.mxu0 0.0
    %182 = vmatpush2.msra.mxu0 0.0
    %183 = vmatprep.subr.mxu0 0.0
    %184 = vmatpush2.msra.mxu0 0.0
    %185 = vmatprep.subr.mxu0 0.0
    %186 = vmatpush2.msra.mxu0 0.0
    %187 = vmatprep.subr.mxu0 0.0
    %188 = vmatpush2.msra.mxu0 0.0
    %189 = vmatprep.subr.mxu0 0.0
    %190 = vmatpush2.msra.mxu0 0.0
    %191 = vmatprep.mubr.f32.mxu0 0.0
    %192 = vmatmul.mubr.f32.gmra.mxu0 %v125
    %v193 = vpop.f32.mrf.mxu0
    %v194 = vadd.f32 %v121, %v193
    %v195 = vpop.f32.mrf.mxu0
    %196 = vdwg.mxu0
    %197 = vst.msk [vmem:[#allocation2] sm:$0xff] %vm33, %v194
    // Predicated region
    $region22: #{checkpoint.1} parent=1 // pred_check
      _
    $region23: #{checkpoint.1} parent=1 // pred_check_branch
      %199 = sbr.rel (0) target = $region25
    $region24: #{checkpoint.1} parent=1 // pred_region
      %s201 = ssub.s32 128, 128
      %202 = vsyncadd [#allocation3], %s201
      %s204 = sshll.u32 [#allocation2], 4
      %s205 = int_to_ptr.vmem [resolvable:$true] %s204
      %207 = dma.vmem_to_hbm [thread:$0]  %s205, 128, %s5, [#allocation3]
    $region25: #{checkpoint.1} parent=1 // pred_fallthru
      _
    // Predicated region
    $region26: #{checkpoint.1} parent=1 // pred_check
      _
    $region27: #{checkpoint.1} parent=1 // pred_check_branch
      %209 = sbr.rel (0) target = $region29
    $region28: #{checkpoint.1} parent=1 // pred_region
      %210 = dma.done [#allocation3], 128
    $region29: #{checkpoint.1} parent=1 // pred_fallthru
      _
    %211 = vsyncpa [#allocation3], 1

</llo_original>
